<compile_context>
chip_gen: v7x
topology: tpu7x:2x2x1
jax: 0.10.0
libtpu: 0.0.40
codegen_flags: <defaults>
</compile_context>

<pallas_src>
import jax
import jax.numpy as jnp
from jax.experimental import pallas as pl
from jax.experimental.pallas import tpu as pltpu

P = 64              # padded hidden feature dim (layers 1..3); row 63 = ones row
ONE_ROW = P - 1
P_IN = 32           # padded input feature dim; row 31 = ones row
ONE_ROW_IN = P_IN - 1
N_CLASSES = 4
C_PAD = 8           # padded class axis (sublane aligned)
N_LAYERS = 4
IN_FEATURES = 30
NEG_MASK = -1e30    # large finite negative (NOT -inf) -> exp underflows to 0, no inf-inf NaN


def classifier_kernel(x_ref, w_ref, out_ref):
    # x_ref:   (P_IN, TB) bf16 activations, batch on lanes, row ONE_ROW_IN == 1.0
    # w_ref:   (4, P, P) bf16 packed [W^T | bias column | ones-propagation];
    #          layer-3 bias rows N_CLASSES..C_PAD-1 hold NEG_MASK (class mask folded in).
    # out_ref: (C_PAD, TB) f32 log-probabilities; rows >= N_CLASSES are ~NEG_MASK and are
    #          sliced off by the wrapper (never reduce over them).
    x = x_ref[...]                                                  # (32, TB) bf16

    # conv1 (30->10) + ReLU — contract only the 32 real input rows (bias via ones row).
    h = jnp.dot(w_ref[0, :, :P_IN], x, preferred_element_type=jnp.float32)
    h = jnp.maximum(h, 0.0).astype(jnp.bfloat16)                    # (64, TB)

    # conv2 (10->30) + Dropout (identity at eval) + ReLU
    h = jnp.dot(w_ref[1], h, preferred_element_type=jnp.float32)
    h = jnp.maximum(h, 0.0).astype(jnp.bfloat16)

    # fc1 (30->50) + ReLU
    h = jnp.dot(w_ref[2], h, preferred_element_type=jnp.float32)
    h = jnp.maximum(h, 0.0).astype(jnp.bfloat16)
    # TODO(synk): training-mode dropout (stochastic masking) not implemented;
    #             inference semantics only.

    # fc2 (50->4): padded class rows come out of the matmul already at NEG_MASK.
    logits = jnp.dot(w_ref[3, :C_PAD, :], h,
                     preferred_element_type=jnp.float32)            # (8, TB) f32

    # log_softmax over the class (sublane) axis, in f32.
    m = jnp.max(logits, axis=0, keepdims=True)
    shifted = logits - m
    lse = jnp.log(jnp.sum(jnp.exp(shifted), axis=0, keepdims=True))
    out_ref[...] = shifted - lse


def _choose_tb(batch, tb_max=2048):
    """Lane-aligned tile width: target tb_max columns, but keep >= 2 grid steps
    when the batch allows it so v7x shards the grid over both TensorCores."""
    half = -(-batch // 2)                       # ceil(batch / 2)
    tb = ((half + 127) // 128) * 128            # round up to a lane multiple
    return max(128, min(tb_max, tb))


def classifier_forward(x, packed_w, *, tb=None):
    """x: (batch, 30) float. packed_w: (4, 64, 64) bf16. Returns (batch, 4) f32 log-probs."""
    batch, feat = x.shape
    if tb is None:
        tb = _choose_tb(batch)
    nb = pl.cdiv(batch, tb)
    batch_pad = nb * tb

    # Build the (32, batch_pad) bf16 transposed activation slab in one fused
    # transpose+concat+pad: rows 0..29 = x^T, row 30 = 0, row 31 = ones.
    # Padded batch columns are all-zero (no bias applied) and produce harmless
    # finite garbage log-probs that are sliced off below.
    xt = jnp.concatenate(
        [x.T.astype(jnp.bfloat16),
         jnp.zeros((1, batch), jnp.bfloat16),
         jnp.ones((1, batch), jnp.bfloat16)],
        axis=0)
    if batch_pad > batch:
        xt = jnp.pad(xt, ((0, 0), (0, batch_pad - batch)))

    flops = 2 * batch_pad * (P * P_IN + P * P + P * P + C_PAD * P)
    transcendentals = batch_pad * (C_PAD + 1)
    bytes_accessed = (P_IN * batch_pad * 2          # bf16 activations in
                      + N_LAYERS * P * P * 2        # bf16 weight slab
                      + C_PAD * batch_pad * 4)      # f32 log-probs out

    out = pl.pallas_call(
        classifier_kernel,
        out_shape=jax.ShapeDtypeStruct((C_PAD, batch_pad), jnp.float32),
        grid=(nb,),
        in_specs=[
            pl.BlockSpec((P_IN, tb), lambda i: (0, i)),            # activations: tiled over batch
            pl.BlockSpec((N_LAYERS, P, P), lambda i: (0, 0, 0)),   # packed params: resident
        ],
        out_specs=pl.BlockSpec((C_PAD, tb), lambda i: (0, i)),
        compiler_params=pltpu.CompilerParams(
            dimension_semantics=("parallel",),
        ),
        cost_estimate=pl.CostEstimate(
            flops=flops,
            transcendentals=transcendentals,
            bytes_accessed=bytes_accessed),
    )(xt, packed_w)

    return out[:N_CLASSES, :batch].T


def init_params(key):
    """Deterministic synthetic parameters matching the PyTorch layer shapes.

    Weights stored as (in, out) (i.e. W^T of PyTorch's (out, in)); biases (out,).
    """
    def linear(key, fan_in, fan_out):
        kw, kb = jax.random.split(key)
        bound = 1.0 / jnp.sqrt(fan_in)
        w = jax.random.uniform(kw, (fan_in, fan_out), jnp.float32, -bound, bound)
        b = jax.random.uniform(kb, (fan_out,), jnp.float32, -bound, bound)
        return w, b

    k1, k2, k3, k4 = jax.random.split(key, 4)
    w1, b1 = linear(k1, 30, 10)   # conv1: Linear(30, 10)
    w2, b2 = linear(k2, 10, 30)   # conv2: Linear(10, 30)
    w3, b3 = linear(k3, 30, 50)   # fc1:   Linear(30, 50)
    w4, b4 = linear(k4, 50, 4)    # fc2:   Linear(50, 4)
    return (w1, b1, w2, b2, w3, b3, w4, b4)


def pack_params(params):
    """Pack the 4 (W, b) pairs into one (4, P, P) bf16 slab.

    Slab layer l holds W_l^T in [:out_l, :in_l] and the bias in the ones-row
    column of the layer's *input* (column 31 for layer 0, column 63 otherwise).
    Layers 0..2 also place a 1 at [ONE_ROW, bias_col] so the activation's ones
    row propagates. The last layer's padded class rows get a NEG_MASK bias so
    the kernel's softmax needs no explicit masking.
    """
    (w1, b1, w2, b2, w3, b3, w4, b4) = params
    packed = jnp.zeros((N_LAYERS, P, P), jnp.float32)
    for l, (w, b) in enumerate(((w1, b1), (w2, b2), (w3, b3), (w4, b4))):
        fan_in, fan_out = w.shape
        bias_col = ONE_ROW_IN if l == 0 else ONE_ROW
        packed = packed.at[l, :fan_out, :fan_in].set(w.T)
        packed = packed.at[l, :fan_out, bias_col].set(b)
        if l < N_LAYERS - 1:
            packed = packed.at[l, ONE_ROW, bias_col].set(1.0)
    packed = packed.at[N_LAYERS - 1, N_CLASSES:C_PAD, ONE_ROW].set(NEG_MASK)
    return packed.astype(jnp.bfloat16)


def reference_forward(x, params):
    (w1, b1, w2, b2, w3, b3, w4, b4) = params
    h = jax.nn.relu(x @ w1 + b1)
    h = jax.nn.relu(h @ w2 + b2)
    h = jax.nn.relu(h @ w3 + b3)
    logits = h @ w4 + b4
    return jax.nn.log_softmax(logits, axis=-1)


if __name__ == "__main__":
    key = jax.random.PRNGKey(0)
    k_params, k_x = jax.random.split(key)

    params = init_params(k_params)
    packed = pack_params(params)

    batch = 8
    x = jax.random.normal(k_x, (batch, IN_FEATURES), jnp.float32)

    fwd = jax.jit(classifier_forward)
    out = jax.block_until_ready(fwd(x, packed))

    ref = reference_forward(x, params)

    assert out.shape == (batch, N_CLASSES)
    row_sums = jnp.sum(jnp.exp(out), axis=-1)
    assert bool(jnp.all(jnp.abs(row_sums - 1.0) < 1e-4)), "log-softmax rows must sum to 1"
    # bf16 matmuls -> loosened tolerance vs the f32 reference.
    max_err = float(jnp.max(jnp.abs(out - ref)))
    assert max_err < 5e-2, f"mismatch vs pure-JAX reference (max abs err {max_err})"

    print("KERNEL_OK")
</pallas_src>

<mosaic_0001>
module attributes {stable_mosaic.version = 11 : i64} {
  func.func @classifier_kernel(%arg0: i32, %arg1: memref<32x128xbf16, #tpu.memory_space<vmem>>, %arg2: memref<4x64x64xbf16, #tpu.memory_space<vmem>>, %arg3: memref<8x128xf32, #tpu.memory_space<vmem>>) attributes {dimension_semantics = [#tpu.dimension_semantics<parallel>], iteration_bounds = array<i64: 1>, scalar_prefetch = 0 : i64, scratch_operands = 0 : i64, tpu.core_type = #tpu.core_type<tc>, window_params = [{transform_indices = @transform_0, window_bounds = array<i64: 32, 128>}, {pipeline_mode = #tpu.pipeline_mode<synchronous>, transform_indices = @transform_1, window_bounds = array<i64: 4, 64, 64>}, {transform_indices = @transform_2, window_bounds = array<i64: 8, 128>}]} {
    %c0 = arith.constant 0 : index
    %c0_0 = arith.constant 0 : index
    %0 = vector.load %arg1[%c0, %c0_0] : memref<32x128xbf16, #tpu.memory_space<vmem>>, vector<32x128xbf16>
    %c0_1 = arith.constant 0 : index
    %c0_2 = arith.constant 0 : index
    %c0_3 = arith.constant 0 : index
    %1 = vector.load %arg2[%c0_1, %c0_2, %c0_3] : memref<4x64x64xbf16, #tpu.memory_space<vmem>>, vector<1x64x32xbf16>
    %2 = vector.shape_cast %1 : vector<1x64x32xbf16> to vector<64x32xbf16>
    %cst = arith.constant dense<0.000000e+00> : vector<64x128xf32>
    %3 = tpu.matmul %2, %0, %cst {dimension_numbers = #tpu.dot_dimension_numbers<[1], [0], [0], [1], [0, 0, 1, 1], [], []>} : vector<64x32xbf16>, vector<32x128xbf16>, vector<64x128xf32> -> vector<64x128xf32>
    %cst_4 = arith.constant 0.000000e+00 : f32
    %4 = vector.broadcast %cst_4 : f32 to vector<64x128xf32>
    %5 = arith.maximumf %3, %4 : vector<64x128xf32>
    %6 = arith.truncf %5 : vector<64x128xf32> to vector<64x128xbf16>
    %c1 = arith.constant 1 : index
    %c0_5 = arith.constant 0 : index
    %c0_6 = arith.constant 0 : index
    %7 = vector.load %arg2[%c1, %c0_5, %c0_6] : memref<4x64x64xbf16, #tpu.memory_space<vmem>>, vector<1x64x64xbf16>
    %8 = vector.shape_cast %7 : vector<1x64x64xbf16> to vector<64x64xbf16>
    %cst_7 = arith.constant dense<0.000000e+00> : vector<64x128xf32>
    %9 = tpu.matmul %8, %6, %cst_7 {dimension_numbers = #tpu.dot_dimension_numbers<[1], [0], [0], [1], [0, 0, 1, 1], [], []>} : vector<64x64xbf16>, vector<64x128xbf16>, vector<64x128xf32> -> vector<64x128xf32>
    %cst_8 = arith.constant 0.000000e+00 : f32
    %10 = vector.broadcast %cst_8 : f32 to vector<64x128xf32>
    %11 = arith.maximumf %9, %10 : vector<64x128xf32>
    %12 = arith.truncf %11 : vector<64x128xf32> to vector<64x128xbf16>
    %c2 = arith.constant 2 : index
    %c0_9 = arith.constant 0 : index
    %c0_10 = arith.constant 0 : index
    %13 = vector.load %arg2[%c2, %c0_9, %c0_10] : memref<4x64x64xbf16, #tpu.memory_space<vmem>>, vector<1x64x64xbf16>
    %14 = vector.shape_cast %13 : vector<1x64x64xbf16> to vector<64x64xbf16>
    %cst_11 = arith.constant dense<0.000000e+00> : vector<64x128xf32>
    %15 = tpu.matmul %14, %12, %cst_11 {dimension_numbers = #tpu.dot_dimension_numbers<[1], [0], [0], [1], [0, 0, 1, 1], [], []>} : vector<64x64xbf16>, vector<64x128xbf16>, vector<64x128xf32> -> vector<64x128xf32>
    %cst_12 = arith.constant 0.000000e+00 : f32
    %16 = vector.broadcast %cst_12 : f32 to vector<64x128xf32>
    %17 = arith.maximumf %15, %16 : vector<64x128xf32>
    %18 = arith.truncf %17 : vector<64x128xf32> to vector<64x128xbf16>
    %c3 = arith.constant 3 : index
    %c0_13 = arith.constant 0 : index
    %c0_14 = arith.constant 0 : index
    %19 = vector.load %arg2[%c3, %c0_13, %c0_14] : memref<4x64x64xbf16, #tpu.memory_space<vmem>>, vector<1x8x64xbf16>
    %20 = vector.shape_cast %19 : vector<1x8x64xbf16> to vector<8x64xbf16>
    %cst_15 = arith.constant dense<0.000000e+00> : vector<8x128xf32>
    %21 = tpu.matmul %20, %18, %cst_15 {dimension_numbers = #tpu.dot_dimension_numbers<[1], [0], [0], [1], [0, 0, 1, 1], [], []>} : vector<8x64xbf16>, vector<64x128xbf16>, vector<8x128xf32> -> vector<8x128xf32>
    %cst_16 = arith.constant dense<0xFF800000> : vector<128xf32>
    %22 = vector.multi_reduction <maximumf>, %21, %cst_16 [0] : vector<8x128xf32> to vector<128xf32>
    %23 = vector.shape_cast %22 : vector<128xf32> to vector<1x128xf32>
    %24 = vector.broadcast %23 : vector<1x128xf32> to vector<8x128xf32>
    %25 = arith.subf %21, %24 : vector<8x128xf32>
    %26 = math.exp %25 : vector<8x128xf32>
    %cst_17 = arith.constant dense<0.000000e+00> : vector<128xf32>
    %27 = vector.multi_reduction <add>, %26, %cst_17 [0] : vector<8x128xf32> to vector<128xf32>
    %28 = vector.shape_cast %27 : vector<128xf32> to vector<1x128xf32>
    %29 = math.log %28 : vector<1x128xf32>
    %30 = vector.broadcast %29 : vector<1x128xf32> to vector<8x128xf32>
    %31 = arith.subf %25, %30 : vector<8x128xf32>
    %c0_18 = arith.constant 0 : index
    %c0_19 = arith.constant 0 : index
    %32 = vector.load %arg3[%c0_18, %c0_19] : memref<8x128xf32, #tpu.memory_space<vmem>>, vector<8x128xf32>
    tpu.vector_store %arg3[%c0_18, %c0_19], %31 {strides = array<i32>} : memref<8x128xf32, #tpu.memory_space<vmem>>, vector<8x128xf32>,
    return
  }
  func.func @transform_0(%arg0: i32) -> (i32, i32) {
    %c0_i32 = arith.constant 0 : i32
    %c0_i32_0 = arith.constant 0 : i32
    return %c0_i32, %arg0 : i32, i32
  }
  func.func @transform_1(%arg0: i32) -> (i32, i32, i32) {
    %c0_i32 = arith.constant 0 : i32
    %c0_i32_0 = arith.constant 0 : i32
    %c0_i32_1 = arith.constant 0 : i32
    %c0_i32_2 = arith.constant 0 : i32
    return %c0_i32, %c0_i32_0, %c0_i32_1 : i32, i32, i32
  }
  func.func @transform_2(%arg0: i32) -> (i32, i32) {
    %c0_i32 = arith.constant 0 : i32
    %c0_i32_0 = arith.constant 0 : i32
    return %c0_i32, %arg0 : i32, i32
  }
}

</mosaic_0001>

<llo_original>
// kernel: classifier_forward.1
$region0: #{classifier_forward.1}
  #allocation0 [shape = 'u32[]', space=smem, size = 0x4, offset = 0x4, fixed_abs, tag = 'smem constant byte address 0x4 - core index']
  #allocation1 [shape = 'u32[144,128]{1,0:T(1,128)}', space=vmem, size = 0x12000, scoped, tag = 'internal scratch']
  %s0 = inlined_call_operand.vmem [shape: bf16[32,128], index: 0, kind: input, shape index: {}]
  %s1 = inlined_call_operand.hbm [shape: bf16[4,64,64], index: 1, kind: input, shape index: {}]
  %s2 = inlined_call_operand.vmem [shape: f32[8,128], index: 2, kind: output, shape index: {}]
  %s3 = sld [smem:[#allocation0]]
  $region22: #{classifier_forward.1} parent=0
    _
  %s5 = ssub.s32 1, %s3
  %s6 = scalar_select 0, %s5, %s3
  $region1: #{classifier_forward.1} parent=0
    #allocation2 [shape = 'u8[65536]{0}', space=vmem, size = 0x10000, scoped, tag = 'input window, operand 1, single buffered']
    #allocation3 [shape = 's32[1]{0}', space=sflag, size = 0x4, scoped, tag = 'scoped memory for classifier_forward.1']
    %7 = vsyncpa [#allocation3], 0
    // Predicated region
    $region2: #{classifier_forward.1} parent=1 // pred_check
      _
    $region3: #{classifier_forward.1} parent=1 // pred_check_branch
      %9 = sbr.rel (0) target = $region5
    $region4: #{classifier_forward.1} parent=1 // pred_region
      _
    $region5: #{classifier_forward.1} parent=1 // pred_fallthru
      _
    // Predicated region
    $region6: #{classifier_forward.1} parent=1 // pred_check
      _
    $region7: #{classifier_forward.1} parent=1 // pred_check_branch
      %11 = sbr.rel (0) target = $region9
    $region8: #{classifier_forward.1} parent=1 // pred_region
      %s13 = ssub.s32 2048, 2048
      %14 = vsyncadd [#allocation3], %s13
      %s15 = sshll.u32 [#allocation2], 4
      %s16 = int_to_ptr.vmem [resolvable:$true] %s15
      %21 = dma.hbm_to_vmem [thread:$0]  %s1, 2048, %s16, [#allocation3], 64, 64, 4
    $region9: #{classifier_forward.1} parent=1 // pred_fallthru
      _
    // Predicated region
    $region10: #{classifier_forward.1} parent=1 // pred_check
      _
    $region11: #{classifier_forward.1} parent=1 // pred_check_branch
      %23 = sbr.rel (0) target = $region13
    $region12: #{classifier_forward.1} parent=1 // pred_region
      %24 = dma.done [#allocation3], 2048
    $region13: #{classifier_forward.1} parent=1 // pred_fallthru
      _
    %v26 = vld [vmem:[%s0] sm:$0xf]
    %v27 = vld [vmem:[%s0 + $0x4] sm:$0xf]
    %v28 = vld [vmem:[%s0 + $0x8] sm:$0xf]
    %v29 = vld [vmem:[%s0 + $0xc] sm:$0xf]
    %v30 = vld [vmem:[#allocation2] sm:$0xf]
    %v31 = vld [vmem:[#allocation2 + $0x4] sm:$0xf]
    %v32 = vld [vmem:[#allocation2 + $0x8] sm:$0xf]
    %v33 = vld [vmem:[#allocation2 + $0xc] sm:$0xf]
    %v34 = vld [vmem:[#allocation2 + $0x10] sm:$0xf]
    %v35 = vld [vmem:[#allocation2 + $0x14] sm:$0xf]
    %v36 = vld [vmem:[#allocation2 + $0x18] sm:$0xf]
    %v37 = vld [vmem:[#allocation2 + $0x1c] sm:$0xf]
    %v46 = vunpack.c.l.b16 %v30
    %v47 = vunpack.c.l.b16 %v31
    %v48 = vunpack.c.l.b16 %v32
    %v49 = vunpack.c.l.b16 %v33
    %v50 = vunpack.c.l.b16 %v34
    %v51 = vunpack.c.l.b16 %v35
    %v52 = vunpack.c.l.b16 %v36
    %v53 = vunpack.c.l.b16 %v37
    %v54 = vpack.c.b16 %v47, %v46
    %v55 = vpack.c.b16 %v49, %v48
    %v56 = vpack.c.b16 %v51, %v50
    %v57 = vpack.c.b16 %v53, %v52
    %v62 = vunpack.c.l.b16 %v26
    %v63 = vunpack.c.l.b16 %v27
    %v64 = vunpack.c.l.b16 %v28
    %v65 = vunpack.c.l.b16 %v29
    %v66 = vpack.c.b16 %v63, %v62
    %v67 = vpack.c.b16 %v65, %v64
    %vm70 = vcmask 261120
    %v72 = vsel %vm70, %v54, 0
    %v75 = vsel %vm70, %v55, 0
    %v78 = vsel %vm70, %v56, 0
    %v81 = vsel %vm70, %v57, 0
    %83 = vmatprep.subr.bf16.mxu0 0
    %84 = vmatpush1.bf16.msra.mxu0 %v66
    %85 = vmatprep.subr.bf16.mxu0 0
    %86 = vmatpush1.bf16.msra.mxu0 %v67
    %87 = vmatprep.subr.bf16.mxu0 0
    %88 = vmatpush1.bf16.msra.mxu0 0
    %89 = vmatprep.subr.bf16.mxu0 0
    %90 = vmatpush1.bf16.msra.mxu0 0
    %91 = vmatprep.subr.bf16.mxu0 0
    %92 = vmatpush1.bf16.msra.mxu0 0
    %93 = vmatprep.subr.bf16.mxu0 0
    %94 = vmatpush1.bf16.msra.mxu0 0
    %95 = vmatprep.subr.bf16.mxu0 0
    %96 = vmatpush1.bf16.msra.mxu0 0
    %97 = vmatprep.subr.bf16.mxu0 0
    %98 = vmatpush1.bf16.msra.mxu0 0
    %99 = vmatprep.subr.bf16.mxu0 0
    %100 = vmatpush1.bf16.msra.mxu0 0
    %101 = vmatprep.subr.bf16.mxu0 0
    %102 = vmatpush1.bf16.msra.mxu0 0
    %103 = vmatprep.subr.bf16.mxu0 0
    %104 = vmatpush1.bf16.msra.mxu0 0
    %105 = vmatprep.subr.bf16.mxu0 0
    %106 = vmatpush1.bf16.msra.mxu0 0
    %107 = vmatprep.subr.bf16.mxu0 0
    %108 = vmatpush1.bf16.msra.mxu0 0
    %109 = vmatprep.subr.bf16.mxu0 0
    %110 = vmatpush1.bf16.msra.mxu0 0
    %111 = vmatprep.subr.bf16.mxu0 0
    %112 = vmatpush1.bf16.msra.mxu0 0
    %113 = vmatprep.subr.bf16.mxu0 0
    %114 = vmatpush1.bf16.msra.mxu0 0
    %115 = vmatprep.mubr.bf16.mxu0 0
    %116 = vmatmul.mubr.bf16.gmra.mrb[0].mxu0 %v72
    %v117 = vpop.f32.mrb[0].mxu0
    %v118 = vadd.f32 0.0, %v117
    %v119 = vpop.f32.mrb[0].mxu0
    %v120 = vpop.f32.mrb[0].mxu0
    %v121 = vadd.f32 0.0, %v120
    %v122 = vpop.f32.mrb[0].mxu0
    %123 = vmatprep.mubr.bf16.mxu0 0
    %124 = vmatmul.mubr.bf16.gmra.mrb[0].mxu0 %v75
    %v125 = vpop.f32.mrb[0].mxu0
    %v126 = vadd.f32 0.0, %v125
    %v127 = vpop.f32.mrb[0].mxu0
    %v128 = vpop.f32.mrb[0].mxu0
    %v129 = vadd.f32 0.0, %v128
    %v130 = vpop.f32.mrb[0].mxu0
    %131 = vmatprep.mubr.bf16.mxu0 0
    %132 = vmatmul.mubr.bf16.gmra.mrb[0].mxu0 %v78
    %v133 = vpop.f32.mrb[0].mxu0
    %v134 = vadd.f32 0.0, %v133
    %v135 = vpop.f32.mrb[0].mxu0
    %v136 = vpop.f32.mrb[0].mxu0
    %v137 = vadd.f32 0.0, %v136
    %v138 = vpop.f32.mrb[0].mxu0
    %139 = vmatprep.mubr.bf16.mxu0 0
    %140 = vmatmul.mubr.bf16.gmra.mrb[0].mxu0 %v81
    %v141 = vpop.f32.mrb[0].mxu0
    %v142 = vadd.f32 0.0, %v141
    %v143 = vpop.f32.mrb[0].mxu0
    %v144 = vpop.f32.mrb[0].mxu0
    %v145 = vadd.f32 0.0, %v144
    %v146 = vpop.f32.mrb[0].mxu0
    %147 = vdwg.mxu0
    %v148 = vmax.f32 %v118, 0.0
    %v149 = vmax.f32 %v121, 0.0
    %v150 = vmax.f32 %v126, 0.0
    %v151 = vmax.f32 %v129, 0.0
    %v152 = vmax.f32 %v134, 0.0
    %v153 = vmax.f32 %v137, 0.0
    %v154 = vmax.f32 %v142, 0.0
    %v155 = vmax.f32 %v145, 0.0
    %v156 = vpack.c.bf16 %v149, %v148
    %v157 = vpack.c.bf16 %v151, %v150
    %v158 = vpack.c.bf16 %v153, %v152
    %v159 = vpack.c.bf16 %v155, %v154
    %s160 = scalar_lea.vmem [#allocation2], 32
    %v161 = vld [vmem:[%s160] sm:$0xf]
    %v162 = vld [vmem:[%s160 + $0x4] sm:$0xf]
    %v163 = vld [vmem:[%s160 + $0x8] sm:$0xf]
    %v164 = vld [vmem:[%s160 + $0xc] sm:$0xf]
    %v165 = vld [vmem:[%s160 + $0x10] sm:$0xf]
    %v166 = vld [vmem:[%s160 + $0x14] sm:$0xf]
    %v167 = vld [vmem:[%s160 + $0x18] sm:$0xf]
    %v168 = vld [vmem:[%s160 + $0x1c] sm:$0xf]
    %v177 = vunpack.c.l.b16 %v161
    %v178 = vunpack.c.l.b16 %v162
    %v179 = vunpack.c.l.b16 %v163
    %v180 = vunpack.c.l.b16 %v164
    %v181 = vunpack.c.l.b16 %v165
    %v182 = vunpack.c.l.b16 %v166
    %v183 = vunpack.c.l.b16 %v167
    %v184 = vunpack.c.l.b16 %v168
    %v185 = vpack.c.b16 %v178, %v177
    %v186 = vpack.c.b16 %v180, %v179
    %v187 = vpack.c.b16 %v182, %v181
    %v188 = vpack.c.b16 %v184, %v183
    %vm189 = vcmask 523264
    %v191 = vsel %vm189, %v185, 0
    %v194 = vsel %vm189, %v186, 0
    %v197 = vsel %vm189, %v187, 0
    %v200 = vsel %vm189, %v188, 0
    %202 = vmatprep.subr.bf16.mxu0 0
    %203 = vmatpush1.bf16.msra.mxu0 %v156
    %204 = vmatprep.subr.bf16.mxu0 0
    %205 = vmatpush1.bf16.msra.mxu0 %v157
    %206 = vmatprep.subr.bf16.mxu0 0
    %207 = vmatpush1.bf16.msra.mxu0 %v158
    %208 = vmatprep.subr.bf16.mxu0 0
    %209 = vmatpush1.bf16.msra.mxu0 %v159
    %210 = vmatprep.subr.bf16.mxu0 0
    %211 = vmatpush1.bf16.msra.mxu0 0
    %212 = vmatprep.subr.bf16.mxu0 0
    %213 = vmatpush1.bf16.msra.mxu0 0
    %214 = vmatprep.subr.bf16.mxu0 0
    %215 = vmatpush1.bf16.msra.mxu0 0
    %216 = vmatprep.subr.bf16.mxu0 0
    %217 = vmatpush1.bf16.msra.mxu0 0
    %218 = vmatprep.subr.bf16.mxu0 0
    %219 = vmatpush1.bf16.msra.mxu0 0
    %220 = vmatprep.subr.bf16.mxu0 0
    %221 = vmatpush1.bf16.msra.mxu0 0
    %222 = vmatprep.subr.bf16.mxu0 0
    %223 = vmatpush1.bf16.msra.mxu0 0
    %224 = vmatprep.subr.bf16.mxu0 0
    %225 = vmatpush1.bf16.msra.mxu0 0
    %226 = vmatprep.subr.bf16.mxu0 0
    %227 = vmatpush1.bf16.msra.mxu0 0
    %228 = vmatprep.subr.bf16.mxu0 0
    %229 = vmatpush1.bf16.msra.mxu0 0
    %230 = vmatprep.subr.bf16.mxu0 0
    %231 = vmatpush1.bf16.msra.mxu0 0
    %232 = vmatprep.subr.bf16.mxu0 0
    %233 = vmatpush1.bf16.msra.mxu0 0
    %234 = vmatprep.mubr.bf16.mxu0 0
    %235 = vmatmul.mubr.bf16.gmra.mrb[0].mxu0 %v191
    %v236 = vpop.f32.mrb[0].mxu0
    %v237 = vadd.f32 0.0, %v236
    %v238 = vpop.f32.mrb[0].mxu0
    %v239 = vpop.f32.mrb[0].mxu0
    %v240 = vadd.f32 0.0, %v239
    %v241 = vpop.f32.mrb[0].mxu0
    %242 = vmatprep.mubr.bf16.mxu0 0
    %243 = vmatmul.mubr.bf16.gmra.mrb[0].mxu0 %v194
    %v244 = vpop.f32.mrb[0].mxu0
    %v245 = vadd.f32 0.0, %v244
    %v246 = vpop.f32.mrb[0].mxu0
    %v247 = vpop.f32.mrb[0].mxu0
    %v248 = vadd.f32 0.0, %v247
    %v249 = vpop.f32.mrb[0].mxu0
    %250 = vmatprep.mubr.bf16.mxu0 0
    %251 = vmatmul.mubr.bf16.gmra.mrb[0].mxu0 %v197
    %v252 = vpop.f32.mrb[0].mxu0
    %v253 = vadd.f32 0.0, %v252
    %v254 = vpop.f32.mrb[0].mxu0
    %v255 = vpop.f32.mrb[0].mxu0
    %v256 = vadd.f32 0.0, %v255
    %v257 = vpop.f32.mrb[0].mxu0
    %258 = vmatprep.mubr.bf16.mxu0 0
    %259 = vmatmul.mubr.bf16.gmra.mrb[0].mxu0 %v200
    %v260 = vpop.f32.mrb[0].mxu0
    %v261 = vadd.f32 0.0, %v260
    %v262 = vpop.f32.mrb[0].mxu0
    %v263 = vpop.f32.mrb[0].mxu0
    %v264 = vadd.f32 0.0, %v263
    %v265 = vpop.f32.mrb[0].mxu0
    %266 = vdwg.mxu0
    %v267 = vmax.f32 %v237, 0.0
    %v268 = vmax.f32 %v240, 0.0
    %v269 = vmax.f32 %v245, 0.0
    %v270 = vmax.f32 %v248, 0.0
    %v271 = vmax.f32 %v253, 0.0
    %v272 = vmax.f32 %v256, 0.0
    %v273 = vmax.f32 %v261, 0.0
    %v274 = vmax.f32 %v264, 0.0
    %v275 = vpack.c.bf16 %v268, %v267
    %v276 = vpack.c.bf16 %v270, %v269
    %v277 = vpack.c.bf16 %v272, %v271
    %v278 = vpack.c.bf16 %v274, %v273
    %s279 = scalar_lea.vmem [#allocation2], 64
    %v280 = vld [vmem:[%s279] sm:$0xf]
    %v281 = vld [vmem:[%s279 + $0x4] sm:$0xf]
    %v282 = vld [vmem:[%s279 + $0x8] sm:$0xf]
    %v283 = vld [vmem:[%s279 + $0xc] sm:$0xf]
    %v284 = vld [vmem:[%s279 + $0x10] sm:$0xf]
    %v285 = vld [vmem:[%s279 + $0x14] sm:$0xf]
    %v286 = vld [vmem:[%s279 + $0x18] sm:$0xf]
    %v287 = vld [vmem:[%s279 + $0x1c] sm:$0xf]
    %v296 = vunpack.c.l.b16 %v280
    %v297 = vunpack.c.l.b16 %v281
    %v298 = vunpack.c.l.b16 %v282
    %v299 = vunpack.c.l.b16 %v283
    %v300 = vunpack.c.l.b16 %v284
    %v301 = vunpack.c.l.b16 %v285
    %v302 = vunpack.c.l.b16 %v286
    %v303 = vunpack.c.l.b16 %v287
    %v304 = vpack.c.b16 %v297, %v296
    %v305 = vpack.c.b16 %v299, %v298
    %v306 = vpack.c.b16 %v301, %v300
    %v307 = vpack.c.b16 %v303, %v302
    %v309 = vsel %vm189, %v304, 0
    %v312 = vsel %vm189, %v305, 0
    %v315 = vsel %vm189, %v306, 0
    %v318 = vsel %vm189, %v307, 0
    %320 = vmatprep.subr.bf16.mxu0 0
    %321 = vmatpush1.bf16.msra.mxu0 %v275
    %322 = vmatprep.subr.bf16.mxu0 0
    %323 = vmatpush1.bf16.msra.mxu0 %v276
    %324 = vmatprep.subr.bf16.mxu0 0
    %325 = vmatpush1.bf16.msra.mxu0 %v277
    %326 = vmatprep.subr.bf16.mxu0 0
    %327 = vmatpush1.bf16.msra.mxu0 %v278
    %328 = vmatprep.subr.bf16.mxu0 0
    %329 = vmatpush1.bf16.msra.mxu0 0
    %330 = vmatprep.subr.bf16.mxu0 0
    %331 = vmatpush1.bf16.msra.mxu0 0
    %332 = vmatprep.subr.bf16.mxu0 0
    %333 = vmatpush1.bf16.msra.mxu0 0
    %334 = vmatprep.subr.bf16.mxu0 0
    %335 = vmatpush1.bf16.msra.mxu0 0
    %336 = vmatprep.subr.bf16.mxu0 0
    %337 = vmatpush1.bf16.msra.mxu0 0
    %338 = vmatprep.subr.bf16.mxu0 0
    %339 = vmatpush1.bf16.msra.mxu0 0
    %340 = vmatprep.subr.bf16.mxu0 0
    %341 = vmatpush1.bf16.msra.mxu0 0
    %342 = vmatprep.subr.bf16.mxu0 0
    %343 = vmatpush1.bf16.msra.mxu0 0
    %344 = vmatprep.subr.bf16.mxu0 0
    %345 = vmatpush1.bf16.msra.mxu0 0
    %346 = vmatprep.subr.bf16.mxu0 0
    %347 = vmatpush1.bf16.msra.mxu0 0
    %348 = vmatprep.subr.bf16.mxu0 0
    %349 = vmatpush1.bf16.msra.mxu0 0
    %350 = vmatprep.subr.bf16.mxu0 0
    %351 = vmatpush1.bf16.msra.mxu0 0
    %352 = vmatprep.mubr.bf16.mxu0 0
    %353 = vmatmul.mubr.bf16.gmra.mrb[0].mxu0 %v309
    %v354 = vpop.f32.mrb[0].mxu0
    %v355 = vadd.f32 0.0, %v354
    %v356 = vpop.f32.mrb[0].mxu0
    %v357 = vpop.f32.mrb[0].mxu0
    %v358 = vadd.f32 0.0, %v357
    %v359 = vpop.f32.mrb[0].mxu0
    %360 = vmatprep.mubr.bf16.mxu0 0
    %361 = vmatmul.mubr.bf16.gmra.mrb[0].mxu0 %v312
    %v362 = vpop.f32.mrb[0].mxu0
    %v363 = vadd.f32 0.0, %v362
    %v364 = vpop.f32.mrb[0].mxu0
    %v365 = vpop.f32.mrb[0].mxu0
    %v366 = vadd.f32 0.0, %v365
    %v367 = vpop.f32.mrb[0].mxu0
    %368 = vmatprep.mubr.bf16.mxu0 0
    %369 = vmatmul.mubr.bf16.gmra.mrb[0].mxu0 %v315
    %v370 = vpop.f32.mrb[0].mxu0
    %v371 = vadd.f32 0.0, %v370
    %v372 = vpop.f32.mrb[0].mxu0
    %v373 = vpop.f32.mrb[0].mxu0
    %v374 = vadd.f32 0.0, %v373
    %v375 = vpop.f32.mrb[0].mxu0
    %376 = vmatprep.mubr.bf16.mxu0 0
    %377 = vmatmul.mubr.bf16.gmra.mrb[0].mxu0 %v318
    %v378 = vpop.f32.mrb[0].mxu0
    %v379 = vadd.f32 0.0, %v378
    %v380 = vpop.f32.mrb[0].mxu0
    %v381 = vpop.f32.mrb[0].mxu0
    %v382 = vadd.f32 0.0, %v381
    %v383 = vpop.f32.mrb[0].mxu0
    %384 = vdwg.mxu0
    %v385 = vmax.f32 %v355, 0.0
    %v386 = vmax.f32 %v358, 0.0
    %v387 = vmax.f32 %v363, 0.0
    %v388 = vmax.f32 %v366, 0.0
    %v389 = vmax.f32 %v371, 0.0
    %v390 = vmax.f32 %v374, 0.0
    %v391 = vmax.f32 %v379, 0.0
    %v392 = vmax.f32 %v382, 0.0
    %v393 = vpack.c.bf16 %v386, %v385
    %v394 = vpack.c.bf16 %v388, %v387
    %v395 = vpack.c.bf16 %v390, %v389
    %v396 = vpack.c.bf16 %v392, %v391
    %s397 = scalar_lea.vmem [#allocation2], 96
    %v398 = vld [vmem:[%s397] sm:$0xf]
    %v400 = vsel %vm189, %v398, 0
    %402 = vmatprep.subr.bf16.mxu0 0
    %403 = vmatpush1.bf16.msra.mxu0 %v393
    %404 = vmatprep.subr.bf16.mxu0 0
    %405 = vmatpush1.bf16.msra.mxu0 %v394
    %406 = vmatprep.subr.bf16.mxu0 0
    %407 = vmatpush1.bf16.msra.mxu0 %v395
    %408 = vmatprep.subr.bf16.mxu0 0
    %409 = vmatpush1.bf16.msra.mxu0 %v396
    %410 = vmatprep.subr.bf16.mxu0 0
    %411 = vmatpush1.bf16.msra.mxu0 0
    %412 = vmatprep.subr.bf16.mxu0 0
    %413 = vmatpush1.bf16.msra.mxu0 0
    %414 = vmatprep.subr.bf16.mxu0 0
    %415 = vmatpush1.bf16.msra.mxu0 0
    %416 = vmatprep.subr.bf16.mxu0 0
    %417 = vmatpush1.bf16.msra.mxu0 0
    %418 = vmatprep.subr.bf16.mxu0 0
    %419 = vmatpush1.bf16.msra.mxu0 0
    %420 = vmatprep.subr.bf16.mxu0 0
    %421 = vmatpush1.bf16.msra.mxu0 0
    %422 = vmatprep.subr.bf16.mxu0 0
    %423 = vmatpush1.bf16.msra.mxu0 0
    %424 = vmatprep.subr.bf16.mxu0 0
    %425 = vmatpush1.bf16.msra.mxu0 0
    %426 = vmatprep.subr.bf16.mxu0 0
    %427 = vmatpush1.bf16.msra.mxu0 0
    %428 = vmatprep.subr.bf16.mxu0 0
    %429 = vmatpush1.bf16.msra.mxu0 0
    %430 = vmatprep.subr.bf16.mxu0 0
    %431 = vmatpush1.bf16.msra.mxu0 0
    %432 = vmatprep.subr.bf16.mxu0 0
    %433 = vmatpush1.bf16.msra.mxu0 0
    %434 = vmatprep.mubr.bf16.mxu0 0
    %435 = vmatmul.mubr.bf16.gmra.mrb[0].mxu0 %v400
    %v436 = vpop.f32.mrb[0].mxu0
    %v437 = vadd.f32 0.0, %v436
    %v438 = vpop.f32.mrb[0].mxu0
    %v439 = vpop.f32.mrb[0].mxu0
    %v440 = vpop.f32.mrb[0].mxu0
    %441 = vdwg.mxu0
    %v442 = vrot.slane %v437, 4
    %v443 = vmax.f32 %v437, %v442
    %v444 = vrot.slane %v443, 2
    %v445 = vmax.f32 %v443, %v444
    %v446 = vrot.slane %v445, 1
    %v447 = vmax.f32 %v445, %v446
    %v448 = vsub.f32 %v437, %v447
    %v449 = vmul.f32 %v448, 1.442695
    %v450 = vpow.pop %v449
    %v451 = vrot.slane %v450, 4
    %v452 = vadd.f32 %v450, %v451
    %v453 = vrot.slane %v452, 2
    %v454 = vadd.f32 %v452, %v453
    %v455 = vrot.slane %v454, 1
    %v456 = vadd.f32 %v454, %v455
    %v457 = vlog2.pop %v456
    %v458 = vmul.f32 %v457, 0.6931472
    %v459 = vsub.f32 %v448, %v458
    %460 = vst [vmem:[%s2] sm:$0xff] %v459
    // Predicated region
    $region14: #{classifier_forward.1} parent=1 // pred_check
      _
    $region15: #{classifier_forward.1} parent=1 // pred_check_branch
      %462 = sbr.rel (0) target = $region17
    $region16: #{classifier_forward.1} parent=1 // pred_region
      _
    $region17: #{classifier_forward.1} parent=1 // pred_fallthru
      _
    // Predicated region
    $region18: #{classifier_forward.1} parent=1 // pred_check
      _
    $region19: #{classifier_forward.1} parent=1 // pred_check_branch
      %464 = sbr.rel (0) target = $region21
    $region20: #{classifier_forward.1} parent=1 // pred_region
      _
    $region21: #{classifier_forward.1} parent=1 // pred_fallthru
      _
    %465 = vsyncpa [#allocation3], 1

</llo_original>
